<compile_context>
chip_gen: v7x
topology: tpu7x:2x2x1
jax: 0.10.0
libtpu: 0.0.40
codegen_flags: <defaults>
</compile_context>

<pallas_src>
import jax
import jax.numpy as jnp
from jax.experimental import pallas as pl
from jax.experimental.pallas import tpu as pltpu

N_IN = 5
HIDDEN = 30
N_OUT = 3

_LANE = 128
_MIN_TILE_B = 8 * 1024    # below this, per-grid-step overhead dominates the DMA time
_MAX_TILE_B = 96 * 1024   # keeps double-buffered tiles + (HIDDEN, tb) activations < ~40 MiB VMEM
_TARGET_TILES = 8         # >= 2 so v7x's second TensorCore gets work; 8 gives headroom


def _round_up(n, m):
    return ((n + m - 1) // m) * m


def _cdiv(a, b):
    return (a + b - 1) // b


def mlp_kernel(xT_ref, w1t_ref, b1_ref, w2t_ref, b2_ref, oT_ref):
    # Lane-dense transposed layout: batch lives on the lane (last) axis.
    xT = xT_ref[...]                                     # (N_IN, TILE_B)
    h = jnp.dot(w1t_ref[...], xT,
                preferred_element_type=jnp.float32)      # (HIDDEN, TILE_B) on MXU
    h = jnp.maximum(h + b1_ref[...], 0.0)                # bias bcast over lanes + ReLU
    y = jnp.dot(w2t_ref[...], h,
                preferred_element_type=jnp.float32)      # (N_OUT, TILE_B) on MXU
    oT_ref[...] = (y + b2_ref[...]).astype(oT_ref.dtype)


def network_forward(x, w1, b1, w2, b2, *, tile_b=64 * 1024, feature_major_out=False):
    """x: (B, N_IN) f32; w1: (N_IN, HIDDEN); b1: (HIDDEN,); w2: (HIDDEN, N_OUT); b2: (N_OUT,).

    Returns (B, N_OUT) f32 (same math as the torch module), or (N_OUT, B) if
    feature_major_out=True (saves the final output-transpose HBM pass)."""
    B = x.shape[0]
    b128 = _round_up(max(B, 1), _LANE)

    # --- tile selection ------------------------------------------------------
    # As large as VMEM allows (amortise ~0.35 us per-grid-step overhead), but
    # split big batches into >= _TARGET_TILES tiles so the "parallel" batch
    # axis can be sharded across v7x's two TensorCores; never below
    # _MIN_TILE_B (unless the whole batch is smaller than that).
    tb = _round_up(min(max(tile_b, _LANE), _MAX_TILE_B), _LANE)
    split_tb = _round_up(_cdiv(b128, _TARGET_TILES), _LANE)
    tb = min(tb, max(_MIN_TILE_B, split_tb))
    tb = max(_LANE, min(tb, b128))
    b_pad = _round_up(b128, tb)
    grid = b_pad // tb

    # --- layout conversion (single fused transpose+pad; no zeros+scatter) ----
    xT = x.T if b_pad == B else jnp.pad(x.T, ((0, 0), (0, b_pad - B)))  # (N_IN, b_pad)
    w1t = w1.T                                                           # (HIDDEN, N_IN)
    w2t = w2.T                                                           # (N_OUT, HIDDEN)
    b1c = b1.reshape(HIDDEN, 1)
    b2c = b2.reshape(N_OUT, 1)

    # Kernel-side HBM traffic (weights fetched once, tiles at real data size).
    flops = 2 * b_pad * (N_IN * HIDDEN + HIDDEN * N_OUT)
    bytes_accessed = 4 * (b_pad * (N_IN + N_OUT)
                          + N_IN * HIDDEN + HIDDEN
                          + HIDDEN * N_OUT + N_OUT)

    # Per-step VMEM: double-buffered x/out tiles (sublane-padded to 8) plus the
    # (HIDDEN, tb) hidden activation Mosaic materialises  ~= 384 * tb bytes.
    vmem_need = 384 * tb + (1 << 20)
    vmem_limit = int(min(max(vmem_need, 32 << 20), 48 << 20))

    oT = pl.pallas_call(
        mlp_kernel,
        out_shape=jax.ShapeDtypeStruct((N_OUT, b_pad), jnp.float32),
        grid_spec=pltpu.PrefetchScalarGridSpec(
            num_scalar_prefetch=0,
            grid=(grid,),
            in_specs=[
                pl.BlockSpec((N_IN, tb), lambda i: (0, i)),        # x tile (batch-tiled)
                pl.BlockSpec((HIDDEN, N_IN), lambda i: (0, 0)),    # W1^T, VMEM-resident
                pl.BlockSpec((HIDDEN, 1), lambda i: (0, 0)),       # b1
                pl.BlockSpec((N_OUT, HIDDEN), lambda i: (0, 0)),   # W2^T, VMEM-resident
                pl.BlockSpec((N_OUT, 1), lambda i: (0, 0)),        # b2
            ],
            out_specs=pl.BlockSpec((N_OUT, tb), lambda i: (0, i)),
        ),
        compiler_params=pltpu.CompilerParams(
            # Independent batch tiles: lets Mosaic shard across v7x's 2 TCs.
            dimension_semantics=("parallel",),
            vmem_limit_bytes=vmem_limit),
        cost_estimate=pl.CostEstimate(
            flops=flops, transcendentals=0, bytes_accessed=bytes_accessed),
    )(xT, w1t, b1c, w2t, b2c)

    if feature_major_out:
        # Preferred fast path: keep (N_OUT, B) so the consumer stays feature-major
        # and no extra HBM transpose pass is paid.
        return oT[:, :B]
    # Torch-compatible (B, N_OUT) row-major layout; drop batch padding.
    return oT[:, :B].T


def init_params(key):
    """Deterministic init mirroring PyTorch Linear's U(-1/sqrt(fan_in), +1/sqrt(fan_in))."""
    k1, k2, k3, k4 = jax.random.split(key, 4)
    bound1 = 1.0 / jnp.sqrt(jnp.float32(N_IN))
    bound2 = 1.0 / jnp.sqrt(jnp.float32(HIDDEN))
    # Stored as (in, out) so the reference computes x @ W (torch stores (out, in)).
    w1 = jax.random.uniform(k1, (N_IN, HIDDEN), jnp.float32, -bound1, bound1)
    b1 = jax.random.uniform(k2, (HIDDEN,), jnp.float32, -bound1, bound1)
    w2 = jax.random.uniform(k3, (HIDDEN, N_OUT), jnp.float32, -bound2, bound2)
    b2 = jax.random.uniform(k4, (N_OUT,), jnp.float32, -bound2, bound2)
    return w1, b1, w2, b2


def _reference(x, w1, b1, w2, b2):
    return jnp.maximum(x @ w1 + b1, 0.0) @ w2 + b2


if __name__ == "__main__":
    key = jax.random.PRNGKey(0)
    pkey, xkey1, xkey2 = jax.random.split(key, 3)
    w1, b1, w2, b2 = init_params(pkey)

    # Small-batch check (single padded tile).
    batch = 8
    x = jax.random.normal(xkey1, (batch, N_IN), jnp.float32)
    out = jax.block_until_ready(network_forward(x, w1, b1, w2, b2))
    ref = _reference(x, w1, b1, w2, b2)
    assert out.shape == (batch, N_OUT)
    assert jnp.allclose(out, ref, atol=1e-5, rtol=1e-5)

    # Multi-tile check: batch not a multiple of the tile -> exercises the
    # batch-tiled grid (grid > 1) and the padding/slice path.
    batch2 = 300
    x2 = jax.random.normal(xkey2, (batch2, N_IN), jnp.float32)
    out2 = jax.block_until_ready(network_forward(x2, w1, b1, w2, b2, tile_b=128))
    ref2 = _reference(x2, w1, b1, w2, b2)
    assert out2.shape == (batch2, N_OUT)
    assert jnp.allclose(out2, ref2, atol=1e-5, rtol=1e-5)

    # Feature-major output path (skips the final transpose HBM pass).
    out3 = jax.block_until_ready(
        network_forward(x2, w1, b1, w2, b2, tile_b=128, feature_major_out=True))
    assert out3.shape == (N_OUT, batch2)
    assert jnp.allclose(out3.T, ref2, atol=1e-5, rtol=1e-5)

    print("KERNEL_OK")
</pallas_src>

<mosaic_0001>
module attributes {stable_mosaic.version = 11 : i64} {
  func.func @mlp_kernel(%arg0: i32, %arg1: memref<5x128xf32, #tpu.memory_space<vmem>>, %arg2: memref<30x5xf32, #tpu.memory_space<vmem>>, %arg3: memref<30x1xf32, #tpu.memory_space<vmem>>, %arg4: memref<3x30xf32, #tpu.memory_space<vmem>>, %arg5: memref<3x1xf32, #tpu.memory_space<vmem>>, %arg6: memref<3x128xf32, #tpu.memory_space<vmem>>) attributes {dimension_semantics = [#tpu.dimension_semantics<parallel>], iteration_bounds = array<i64: 1>, scalar_prefetch = 0 : i64, scratch_operands = 0 : i64, tpu.core_type = #tpu.core_type<tc>, window_params = [{transform_indices = @transform_0, window_bounds = array<i64: 5, 128>}, {pipeline_mode = #tpu.pipeline_mode<synchronous>, transform_indices = @transform_1, window_bounds = array<i64: 30, 5>}, {pipeline_mode = #tpu.pipeline_mode<synchronous>, transform_indices = @transform_2, window_bounds = array<i64: 30, 1>}, {pipeline_mode = #tpu.pipeline_mode<synchronous>, transform_indices = @transform_3, window_bounds = array<i64: 3, 30>}, {pipeline_mode = #tpu.pipeline_mode<synchronous>, transform_indices = @transform_4, window_bounds = array<i64: 3, 1>}, {transform_indices = @transform_5, window_bounds = array<i64: 3, 128>}]} {
    %c0 = arith.constant 0 : index
    %c0_0 = arith.constant 0 : index
    %0 = vector.load %arg1[%c0, %c0_0] : memref<5x128xf32, #tpu.memory_space<vmem>>, vector<5x128xf32>
    %c0_1 = arith.constant 0 : index
    %c0_2 = arith.constant 0 : index
    %1 = vector.load %arg2[%c0_1, %c0_2] : memref<30x5xf32, #tpu.memory_space<vmem>>, vector<30x5xf32>
    %cst = arith.constant dense<0.000000e+00> : vector<30x128xf32>
    %2 = tpu.matmul %1, %0, %cst {dimension_numbers = #tpu.dot_dimension_numbers<[1], [0], [0], [1], [0, 0, 1, 1], [], []>} : vector<30x5xf32>, vector<5x128xf32>, vector<30x128xf32> -> vector<30x128xf32>
    %c0_3 = arith.constant 0 : index
    %c0_4 = arith.constant 0 : index
    %3 = vector.load %arg3[%c0_3, %c0_4] : memref<30x1xf32, #tpu.memory_space<vmem>>, vector<30x1xf32>
    %4 = vector.broadcast %3 : vector<30x1xf32> to vector<30x128xf32>
    %5 = arith.addf %2, %4 : vector<30x128xf32>
    %cst_5 = arith.constant 0.000000e+00 : f32
    %6 = vector.broadcast %cst_5 : f32 to vector<30x128xf32>
    %7 = arith.maximumf %5, %6 : vector<30x128xf32>
    %c0_6 = arith.constant 0 : index
    %c0_7 = arith.constant 0 : index
    %8 = vector.load %arg4[%c0_6, %c0_7] : memref<3x30xf32, #tpu.memory_space<vmem>>, vector<3x30xf32>
    %cst_8 = arith.constant dense<0.000000e+00> : vector<3x128xf32>
    %9 = tpu.matmul %8, %7, %cst_8 {dimension_numbers = #tpu.dot_dimension_numbers<[1], [0], [0], [1], [0, 0, 1, 1], [], []>} : vector<3x30xf32>, vector<30x128xf32>, vector<3x128xf32> -> vector<3x128xf32>
    %c0_9 = arith.constant 0 : index
    %c0_10 = arith.constant 0 : index
    %10 = vector.load %arg5[%c0_9, %c0_10] : memref<3x1xf32, #tpu.memory_space<vmem>>, vector<3x1xf32>
    %11 = vector.broadcast %10 : vector<3x1xf32> to vector<3x128xf32>
    %12 = arith.addf %9, %11 : vector<3x128xf32>
    %c0_11 = arith.constant 0 : index
    %c0_12 = arith.constant 0 : index
    %13 = vector.load %arg6[%c0_11, %c0_12] : memref<3x128xf32, #tpu.memory_space<vmem>>, vector<3x128xf32>
    tpu.vector_store %arg6[%c0_11, %c0_12], %12 {strides = array<i32>} : memref<3x128xf32, #tpu.memory_space<vmem>>, vector<3x128xf32>,
    return
  }
  func.func @transform_0(%arg0: i32) -> (i32, i32) {
    %c0_i32 = arith.constant 0 : i32
    %c0_i32_0 = arith.constant 0 : i32
    return %c0_i32, %arg0 : i32, i32
  }
  func.func @transform_1(%arg0: i32) -> (i32, i32) {
    %c0_i32 = arith.constant 0 : i32
    %c0_i32_0 = arith.constant 0 : i32
    %c0_i32_1 = arith.constant 0 : i32
    return %c0_i32, %c0_i32_0 : i32, i32
  }
  func.func @transform_2(%arg0: i32) -> (i32, i32) {
    %c0_i32 = arith.constant 0 : i32
    %c0_i32_0 = arith.constant 0 : i32
    %c0_i32_1 = arith.constant 0 : i32
    return %c0_i32, %c0_i32_0 : i32, i32
  }
  func.func @transform_3(%arg0: i32) -> (i32, i32) {
    %c0_i32 = arith.constant 0 : i32
    %c0_i32_0 = arith.constant 0 : i32
    %c0_i32_1 = arith.constant 0 : i32
    return %c0_i32, %c0_i32_0 : i32, i32
  }
  func.func @transform_4(%arg0: i32) -> (i32, i32) {
    %c0_i32 = arith.constant 0 : i32
    %c0_i32_0 = arith.constant 0 : i32
    %c0_i32_1 = arith.constant 0 : i32
    return %c0_i32, %c0_i32_0 : i32, i32
  }
  func.func @transform_5(%arg0: i32) -> (i32, i32) {
    %c0_i32 = arith.constant 0 : i32
    %c0_i32_0 = arith.constant 0 : i32
    return %c0_i32, %arg0 : i32, i32
  }
}

</mosaic_0001>

<llo_original>
// kernel: tpu_custom_call.1
$region0: #{tpu_custom_call.1}
  #allocation0 [shape = 'u32[]', space=smem, size = 0x4, offset = 0x4, fixed_abs, tag = 'smem constant byte address 0x4 - core index']
  #allocation1 [shape = 'u32[144,128]{1,0:T(1,128)}', space=vmem, size = 0x12000, scoped, tag = 'internal scratch']
  %s0 = inlined_call_operand.vmem [shape: f32[5,128], index: 0, kind: input, shape index: {}]
  %s1 = inlined_call_operand.vmem [shape: f32[30,5], index: 1, kind: input, shape index: {}]
  %s2 = inlined_call_operand.vmem [shape: f32[30,1], index: 2, kind: input, shape index: {}]
  %s3 = inlined_call_operand.vmem [shape: f32[3,30], index: 3, kind: input, shape index: {}]
  %s4 = inlined_call_operand.vmem [shape: f32[3,1], index: 4, kind: input, shape index: {}]
  %s5 = inlined_call_operand.hbm [shape: f32[3,128], index: 5, kind: output, shape index: {}]
  %s6 = sld [smem:[#allocation0]]
  $region30: #{tpu_custom_call.1} parent=0
    _
  %s8 = ssub.s32 1, %s6
  %s9 = scalar_select 0, %s8, %s6
  $region1: #{tpu_custom_call.1} parent=0
    #allocation2 [shape = 'u8[2048]{0}', space=vmem, size = 0x800, scoped, tag = 'output window, operand 0, single buffered']
    #allocation3 [shape = 's32[1]{0}', space=sflag, size = 0x4, scoped, tag = 'scoped memory for tpu_custom_call.1']
    %10 = vsyncpa [#allocation3], 0
    // Predicated region
    $region2: #{tpu_custom_call.1} parent=1 // pred_check
      _
    $region3: #{tpu_custom_call.1} parent=1 // pred_check_branch
      %12 = sbr.rel (0) target = $region5
    $region4: #{tpu_custom_call.1} parent=1 // pred_region
      _
    $region5: #{tpu_custom_call.1} parent=1 // pred_fallthru
      _
    // Predicated region
    $region6: #{tpu_custom_call.1} parent=1 // pred_check
      _
    $region7: #{tpu_custom_call.1} parent=1 // pred_check_branch
      %14 = sbr.rel (0) target = $region9
    $region8: #{tpu_custom_call.1} parent=1 // pred_region
      _
    $region9: #{tpu_custom_call.1} parent=1 // pred_fallthru
      _
    // Predicated region
    $region10: #{tpu_custom_call.1} parent=1 // pred_check
      _
    $region11: #{tpu_custom_call.1} parent=1 // pred_check_branch
      %16 = sbr.rel (0) target = $region13
    $region12: #{tpu_custom_call.1} parent=1 // pred_region
      _
    $region13: #{tpu_custom_call.1} parent=1 // pred_fallthru
      _
    // Predicated region
    $region14: #{tpu_custom_call.1} parent=1 // pred_check
      _
    $region15: #{tpu_custom_call.1} parent=1 // pred_check_branch
      %18 = sbr.rel (0) target = $region17
    $region16: #{tpu_custom_call.1} parent=1 // pred_region
      _
    $region17: #{tpu_custom_call.1} parent=1 // pred_fallthru
      _
    // Predicated region
    $region18: #{tpu_custom_call.1} parent=1 // pred_check
      _
    $region19: #{tpu_custom_call.1} parent=1 // pred_check_branch
      %20 = sbr.rel (0) target = $region21
    $region20: #{tpu_custom_call.1} parent=1 // pred_region
      _
    $region21: #{tpu_custom_call.1} parent=1 // pred_fallthru
      _
    %v21 = vld [vmem:[%s0] sm:$0x1f]
    %v22 = vld [vmem:[%s1] sm:$0xff]
    %v23 = vld [vmem:[%s1 + $0x8] sm:$0xff]
    %v24 = vld [vmem:[%s1 + $0x10] sm:$0xff]
    %v25 = vld [vmem:[%s1 + $0x18] sm:$0x3f]
    %v26 = vld [vmem:[%s2] sm:$0xff]
    %v27 = vld [vmem:[%s2 + $0x8] sm:$0xff]
    %v28 = vld [vmem:[%s2 + $0x10] sm:$0xff]
    %v29 = vld [vmem:[%s2 + $0x18] sm:$0x3f]
    %31 = vset.pattern.permute.xlu0 0
    %32 = vperm.xlu0 %31, %v26
    %v33 = vpop.permute.xlu0 %32
    %36 = vset.pattern.permute.xlu0 0
    %37 = vperm.xlu0 %36, %v27
    %v38 = vpop.permute.xlu0 %37
    %41 = vset.pattern.permute.xlu0 0
    %42 = vperm.xlu0 %41, %v28
    %v43 = vpop.permute.xlu0 %42
    %46 = vset.pattern.permute.xlu0 0
    %47 = vperm.xlu0 %46, %v29
    %v48 = vpop.permute.xlu0 %47
    %vm50 = vcmask 39936
    %v52 = vsel %vm50, %v22, 0
    %v55 = vsel %vm50, %v23, 0
    %v58 = vsel %vm50, %v24, 0
    %v61 = vsel %vm50, %v25, 0
    %vm63 = vcmask 1044480
    %v65 = vsel %vm63, %v21, 0
    %67 = vmatprep.subr.mxu0 0.0
    %68 = vmatpush1.msra.mxu0 %v65
    %69 = vmatprep.subr.mxu0 0.0
    %70 = vmatpush1.msra.mxu0 0.0
    %71 = vmatprep.subr.mxu0 0.0
    %72 = vmatpush1.msra.mxu0 0.0
    %73 = vmatprep.subr.mxu0 0.0
    %74 = vmatpush1.msra.mxu0 0.0
    %75 = vmatprep.subr.mxu0 0.0
    %76 = vmatpush1.msra.mxu0 0.0
    %77 = vmatprep.subr.mxu0 0.0
    %78 = vmatpush1.msra.mxu0 0.0
    %79 = vmatprep.subr.mxu0 0.0
    %80 = vmatpush1.msra.mxu0 0.0
    %81 = vmatprep.subr.mxu0 0.0
    %82 = vmatpush1.msra.mxu0 0.0
    %83 = vmatprep.subr.mxu0 0.0
    %84 = vmatpush1.msra.mxu0 0.0
    %85 = vmatprep.subr.mxu0 0.0
    %86 = vmatpush1.msra.mxu0 0.0
    %87 = vmatprep.subr.mxu0 0.0
    %88 = vmatpush1.msra.mxu0 0.0
    %89 = vmatprep.subr.mxu0 0.0
    %90 = vmatpush1.msra.mxu0 0.0
    %91 = vmatprep.subr.mxu0 0.0
    %92 = vmatpush1.msra.mxu0 0.0
    %93 = vmatprep.subr.mxu0 0.0
    %94 = vmatpush1.msra.mxu0 0.0
    %95 = vmatprep.subr.mxu0 0.0
    %96 = vmatpush1.msra.mxu0 0.0
    %97 = vmatprep.subr.mxu0 0.0
    %98 = vmatpush1.msra.mxu0 0.0
    %99 = vmatprep.subr.mxu0 0.0
    %100 = vmatpush1.msra.mxu0 0.0
    %101 = vmatprep.subr.mxu0 0.0
    %102 = vmatpush1.msra.mxu0 0.0
    %103 = vmatprep.subr.mxu0 0.0
    %104 = vmatpush1.msra.mxu0 0.0
    %105 = vmatprep.subr.mxu0 0.0
    %106 = vmatpush1.msra.mxu0 0.0
    %107 = vmatprep.subr.mxu0 0.0
    %108 = vmatpush1.msra.mxu0 0.0
    %109 = vmatprep.subr.mxu0 0.0
    %110 = vmatpush1.msra.mxu0 0.0
    %111 = vmatprep.subr.mxu0 0.0
    %112 = vmatpush1.msra.mxu0 0.0
    %113 = vmatprep.subr.mxu0 0.0
    %114 = vmatpush1.msra.mxu0 0.0
    %115 = vmatprep.subr.mxu0 0.0
    %116 = vmatpush1.msra.mxu0 0.0
    %117 = vmatprep.subr.mxu0 0.0
    %118 = vmatpush1.msra.mxu0 0.0
    %119 = vmatprep.subr.mxu0 0.0
    %120 = vmatpush1.msra.mxu0 0.0
    %121 = vmatprep.subr.mxu0 0.0
    %122 = vmatpush1.msra.mxu0 0.0
    %123 = vmatprep.subr.mxu0 0.0
    %124 = vmatpush1.msra.mxu0 0.0
    %125 = vmatprep.subr.mxu0 0.0
    %126 = vmatpush1.msra.mxu0 0.0
    %127 = vmatprep.subr.mxu0 0.0
    %128 = vmatpush1.msra.mxu0 0.0
    %129 = vmatprep.subr.mxu0 0.0
    %130 = vmatpush1.msra.mxu0 0.0
    %131 = vmatprep.mubr.f32.mxu0 0.0
    %132 = vmatmul.mubr.f32.gmra.mrb[0].mxu0 %v52
    %v133 = vpop.f32.mrb[0].mxu0
    %v134 = vadd.f32 %v33, %v133
    %v135 = vpop.f32.mrb[0].mxu0
    %136 = vmatprep.mubr.f32.mxu0 0.0
    %137 = vmatmul.mubr.f32.gmra.mrb[0].mxu0 %v55
    %v138 = vpop.f32.mrb[0].mxu0
    %v139 = vadd.f32 %v38, %v138
    %v140 = vpop.f32.mrb[0].mxu0
    %141 = vmatprep.mubr.f32.mxu0 0.0
    %142 = vmatmul.mubr.f32.gmra.mrb[0].mxu0 %v58
    %v143 = vpop.f32.mrb[0].mxu0
    %v144 = vadd.f32 %v43, %v143
    %v145 = vpop.f32.mrb[0].mxu0
    %146 = vmatprep.mubr.f32.mxu0 0.0
    %147 = vmatmul.mubr.f32.gmra.mrb[0].mxu0 %v61
    %v148 = vpop.f32.mrb[0].mxu0
    %v149 = vadd.f32 %v48, %v148
    %v150 = vpop.f32.mrb[0].mxu0
    %151 = vdwg.mxu0
    %v152 = vmax.f32 %v134, 0.0
    %v153 = vmax.f32 %v139, 0.0
    %v154 = vmax.f32 %v144, 0.0
    %v155 = vmax.f32 %v149, 0.0
    %v156 = vld [vmem:[%s3] sm:$0x7]
    %v157 = vld [vmem:[%s4] sm:$0x7]
    %159 = vset.pattern.permute.xlu0 0
    %160 = vperm.xlu0 %159, %v157
    %v161 = vpop.permute.xlu0 %160
    %vm163 = vcmask 244736
    %v165 = vsel %vm163, %v156, 0
    %vm167 = vcmask 1045504
    %v169 = vsel %vm167, %v155, 0
    %171 = vmatprep.subr.mxu0 0.0
    %172 = vmatpush1.msra.mxu0 %v152
    %173 = vmatprep.subr.mxu0 0.0
    %174 = vmatpush1.msra.mxu0 %v153
    %175 = vmatprep.subr.mxu0 0.0
    %176 = vmatpush1.msra.mxu0 %v154
    %177 = vmatprep.subr.mxu0 0.0
    %178 = vmatpush1.msra.mxu0 %v169
    %179 = vmatprep.subr.mxu0 0.0
    %180 = vmatpush1.msra.mxu0 0.0
    %181 = vmatprep.subr.mxu0 0.0
    %182 = vmatpush1.msra.mxu0 0.0
    %183 = vmatprep.subr.mxu0 0.0
    %184 = vmatpush1.msra.mxu0 0.0
    %185 = vmatprep.subr.mxu0 0.0
    %186 = vmatpush1.msra.mxu0 0.0
    %187 = vmatprep.subr.mxu0 0.0
    %188 = vmatpush1.msra.mxu0 0.0
    %189 = vmatprep.subr.mxu0 0.0
    %190 = vmatpush1.msra.mxu0 0.0
    %191 = vmatprep.subr.mxu0 0.0
    %192 = vmatpush1.msra.mxu0 0.0
    %193 = vmatprep.subr.mxu0 0.0
    %194 = vmatpush1.msra.mxu0 0.0
    %195 = vmatprep.subr.mxu0 0.0
    %196 = vmatpush1.msra.mxu0 0.0
    %197 = vmatprep.subr.mxu0 0.0
    %198 = vmatpush1.msra.mxu0 0.0
    %199 = vmatprep.subr.mxu0 0.0
    %200 = vmatpush1.msra.mxu0 0.0
    %201 = vmatprep.subr.mxu0 0.0
    %202 = vmatpush1.msra.mxu0 0.0
    %203 = vmatprep.subr.mxu0 0.0
    %204 = vmatpush1.msra.mxu0 0.0
    %205 = vmatprep.subr.mxu0 0.0
    %206 = vmatpush1.msra.mxu0 0.0
    %207 = vmatprep.subr.mxu0 0.0
    %208 = vmatpush1.msra.mxu0 0.0
    %209 = vmatprep.subr.mxu0 0.0
    %210 = vmatpush1.msra.mxu0 0.0
    %211 = vmatprep.subr.mxu0 0.0
    %212 = vmatpush1.msra.mxu0 0.0
    %213 = vmatprep.subr.mxu0 0.0
    %214 = vmatpush1.msra.mxu0 0.0
    %215 = vmatprep.subr.mxu0 0.0
    %216 = vmatpush1.msra.mxu0 0.0
    %217 = vmatprep.subr.mxu0 0.0
    %218 = vmatpush1.msra.mxu0 0.0
    %219 = vmatprep.subr.mxu0 0.0
    %220 = vmatpush1.msra.mxu0 0.0
    %221 = vmatprep.subr.mxu0 0.0
    %222 = vmatpush1.msra.mxu0 0.0
    %223 = vmatprep.subr.mxu0 0.0
    %224 = vmatpush1.msra.mxu0 0.0
    %225 = vmatprep.subr.mxu0 0.0
    %226 = vmatpush1.msra.mxu0 0.0
    %227 = vmatprep.subr.mxu0 0.0
    %228 = vmatpush1.msra.mxu0 0.0
    %229 = vmatprep.subr.mxu0 0.0
    %230 = vmatpush1.msra.mxu0 0.0
    %231 = vmatprep.subr.mxu0 0.0
    %232 = vmatpush1.msra.mxu0 0.0
    %233 = vmatprep.subr.mxu0 0.0
    %234 = vmatpush1.msra.mxu0 0.0
    %235 = vmatprep.mubr.f32.mxu0 0.0
    %236 = vmatmul.mubr.f32.gmra.mrb[0].mxu0 %v165
    %v237 = vpop.f32.mrb[0].mxu0
    %v238 = vadd.f32 %v161, %v237
    %v239 = vpop.f32.mrb[0].mxu0
    %240 = vdwg.mxu0
    %241 = vst [vmem:[#allocation2] sm:$0x7] %v238
    // Predicated region
    $region22: #{tpu_custom_call.1} parent=1 // pred_check
      _
    $region23: #{tpu_custom_call.1} parent=1 // pred_check_branch
      %243 = sbr.rel (0) target = $region25
    $region24: #{tpu_custom_call.1} parent=1 // pred_region
      %s245 = ssub.s32 64, 64
      %246 = vsyncadd [#allocation3], %s245
      %s248 = sshll.u32 [#allocation2], 4
      %s249 = int_to_ptr.vmem [resolvable:$true] %s248
      %251 = dma.vmem_to_hbm [thread:$0]  %s249, 64, %s5, [#allocation3]
    $region25: #{tpu_custom_call.1} parent=1 // pred_fallthru
      _
    // Predicated region
    $region26: #{tpu_custom_call.1} parent=1 // pred_check
      _
    $region27: #{tpu_custom_call.1} parent=1 // pred_check_branch
      %253 = sbr.rel (0) target = $region29
    $region28: #{tpu_custom_call.1} parent=1 // pred_region
      %254 = dma.done [#allocation3], 64
    $region29: #{tpu_custom_call.1} parent=1 // pred_fallthru
      _
    %255 = vsyncpa [#allocation3], 1

</llo_original>
